<compile_context>
chip_gen: v7x
topology: tpu7x:2x2x1
jax: 0.10.0
libtpu: 0.0.40
codegen_flags: <defaults>
</compile_context>

<pallas_src>
import functools

import jax
import jax.numpy as jnp
from jax.experimental import pallas as pl
from jax.experimental.pallas import tpu as pltpu

LSTM_NEUROES = 32   # stand-in for ae.ENCODED_TENSOR_SIZE
NUM_LAYERS = 2
BATCH = 2
SEQ_STEPS = 8       # number of autoregressive decode steps fused into one kernel call


def _lstm_decode_kernel(x_ref, s0_ref, wg_ref, ws_ref, b_ref, o_ref,
                        h_scr, c_scr, prev_scr):
    """One time step of the decoder; grid axis 0 = time (sequential / 'arbitrary')."""
    L, B, H = h_scr.shape
    t = pl.program_id(0)

    # Step 0: load initial (prev_output, h_0, c_0) into persistent VMEM scratch.
    @pl.when(t == 0)
    def _():
        prev_scr[...] = s0_ref[0]
        h_scr[...] = s0_ref[1:1 + L]
        c_scr[...] = s0_ref[1 + L:1 + 2 * L]

    x = x_ref[0]                         # (B, D)
    prev = prev_scr[...]                 # (B, O)

    # input_fc(cat(x, prev)) == x @ W_x + prev @ W_prev + b_infc  (no lane concat)
    layer_in = (jnp.dot(x, ws_ref[0], preferred_element_type=jnp.float32)
                + jnp.dot(prev, ws_ref[1], preferred_element_type=jnp.float32)
                + b_ref[L:L + 1, 0:H])                           # (B, H)

    # Hoist both hidden-state matmuls (they only depend on step t-1 state) so the MXU
    # pipelines them before the per-layer elementwise/EUP chains.
    hh = [jnp.dot(h_scr[l], wg_ref[l, H:, :], preferred_element_type=jnp.float32)
          for l in range(L)]                                     # each (B, 4H)

    for l in range(L):                   # static unroll over layers
        gates = (jnp.dot(layer_in, wg_ref[l, :H, :],
                         preferred_element_type=jnp.float32)
                 + hh[l] + b_ref[l:l + 1, :])                    # (B, 4H), order (i,f,g,o)
        # Full-vreg activations: one sigmoid + one tanh over all 4H lanes, slice after.
        sg = jax.nn.sigmoid(gates)
        th = jnp.tanh(gates)
        i = sg[:, 0 * H:1 * H]
        f = sg[:, 1 * H:2 * H]
        g = th[:, 2 * H:3 * H]
        o = sg[:, 3 * H:4 * H]
        c_new = f * c_scr[l] + i * g
        h_new = o * jnp.tanh(c_new)
        h_scr[l] = h_new
        c_scr[l] = c_new
        layer_in = h_new

    # fc(top-layer h); feed it back as next step's prev_output.
    out = (jnp.dot(layer_in, ws_ref[2], preferred_element_type=jnp.float32)
           + b_ref[L + 1:L + 2, 0:H])                            # (B, O)
    prev_scr[...] = out

    # Single packed per-step output slab: [out | h_0..h_{L-1} | c_0..c_{L-1}]
    pieces = [out] + [h_scr[l] for l in range(L)] + [c_scr[l] for l in range(L)]
    o_ref[0] = jnp.concatenate(pieces, axis=1)                   # (B, (1+2L)*H)


def pack_params(params, input_size, hidden_size, output_size, num_layers):
    """One-time parameter packing (cache the result): 9 arrays -> 3 DMA-friendly arrays."""
    D, H, O, L = input_size, hidden_size, output_size, num_layers
    assert D == H == O, "module defaults assume input_size == hidden_size == output_size"
    G = 4 * H
    # (L, D+H, 4H): rows [0:D] = w_ih[l], rows [D:] = w_hh[l]
    w_gates = jnp.concatenate([params["w_ih"], params["w_hh"]], axis=1)
    # (3, D, D): [W_x, W_prev, W_fc]  (w_infc split statically -> no in-kernel concat)
    w_small = jnp.stack([params["w_infc"][:D], params["w_infc"][D:], params["w_fc"]])
    # (L+2, 4H): rows [0:L] = fused LSTM gate biases, row L = b_infc (padded), row L+1 = b_fc
    b_pack = jnp.concatenate(
        [params["b_g"][:, 0, :],
         jnp.pad(params["b_infc"], ((0, 0), (0, G - D))),
         jnp.pad(params["b_fc"], ((0, 0), (0, G - O)))],
        axis=0)
    return {"w_gates": w_gates, "w_small": w_small, "b_pack": b_pack}


@jax.jit
def lstm_decode(x_seq, prev_output, h0, c0, packed):
    """Run T autoregressive decoder steps in one pallas_call.

    x_seq: (T, B, D) per-step external inputs; prev_output: (B, O) initial feedback;
    h0, c0: (L, B, H). Returns (out_seq (T,B,O), h_T (L,B,H), c_T (L,B,H)).
    Each step is exactly the PyTorch module's forward (T=1 == single forward call).
    """
    T, B, D = x_seq.shape
    L, _, H = h0.shape
    W = (1 + 2 * L) * H                   # packed output lanes per step

    state0 = jnp.concatenate([prev_output[None], h0, c0], axis=0)   # (1+2L, B, H)

    grid_spec = pltpu.PrefetchScalarGridSpec(
        num_scalar_prefetch=0,
        grid=(T,),
        in_specs=[
            pl.BlockSpec((1, B, D), lambda t: (t, 0, 0)),              # x_t (streamed)
            pl.BlockSpec((1 + 2 * L, B, H), lambda t: (0, 0, 0)),      # initial state (once)
            pl.BlockSpec((L, D + H, 4 * H), lambda t: (0, 0, 0)),      # w_ih|w_hh (resident)
            pl.BlockSpec((3, D, D), lambda t: (0, 0, 0)),              # W_x,W_prev,W_fc (resident)
            pl.BlockSpec((L + 2, 4 * H), lambda t: (0, 0)),            # biases (resident)
        ],
        out_specs=pl.BlockSpec((1, B, W), lambda t: (t, 0, 0)),        # packed slab per step
        scratch_shapes=[
            pltpu.VMEM((L, B, H), jnp.float32),    # h state, carried across time
            pltpu.VMEM((L, B, H), jnp.float32),    # c state
            pltpu.VMEM((B, H), jnp.float32),       # prev_output feedback
        ],
    )

    slab = pl.pallas_call(
        _lstm_decode_kernel,
        out_shape=jax.ShapeDtypeStruct((T, B, W), jnp.float32),
        grid_spec=grid_spec,
        compiler_params=pltpu.CompilerParams(dimension_semantics=("arbitrary",)),
    )(x_seq, state0, packed["w_gates"], packed["w_small"], packed["b_pack"])

    out_seq = slab[:, :, :H]
    h_fin = slab[-1, :, H:(1 + L) * H].reshape(B, L, H).transpose(1, 0, 2)
    c_fin = slab[-1, :, (1 + L) * H:].reshape(B, L, H).transpose(1, 0, 2)
    return out_seq, h_fin, c_fin


def init_params(key, input_size, hidden_size, output_size, num_layers):
    """Deterministic synthetic parameters (PyTorch-style uniform(-1/sqrt(H), 1/sqrt(H)))."""
    H = hidden_size
    bound = 1.0 / jnp.sqrt(jnp.float32(H))
    ks = jax.random.split(key, 8)
    u = lambda k, shape: jax.random.uniform(k, shape, jnp.float32, -bound, bound)
    assert input_size == hidden_size
    return {
        # input_fc: Linear(input+output -> input), stored transposed
        "w_infc": u(ks[0], (input_size + output_size, input_size)),
        "b_infc": u(ks[1], (1, input_size)),
        # per-layer LSTM weights, transposed: (L, in, 4H) / (L, H, 4H); bias = b_ih + b_hh fused
        "w_ih": u(ks[2], (num_layers, input_size, 4 * H)),
        "w_hh": u(ks[3], (num_layers, H, 4 * H)),
        "b_g": u(ks[4], (num_layers, 1, 4 * H)),
        # fc: Linear(H -> output), stored transposed
        "w_fc": u(ks[5], (H, output_size)),
        "b_fc": u(ks[6], (1, output_size)),
    }


def _reference_decode(x_seq, prev0, h0, c0, p):
    """Pure-JAX reference: the PyTorch single-step forward applied T times with feedback."""
    H = h0.shape[-1]
    L = h0.shape[0]

    def step(x, prev, h, c):
        cat = jnp.concatenate([x, prev], axis=1)
        layer_in = cat @ p["w_infc"] + p["b_infc"]
        hs, cs = [], []
        for l in range(L):
            gates = layer_in @ p["w_ih"][l] + h[l] @ p["w_hh"][l] + p["b_g"][l]
            i = jax.nn.sigmoid(gates[:, :H])
            f = jax.nn.sigmoid(gates[:, H:2 * H])
            g = jnp.tanh(gates[:, 2 * H:3 * H])
            o = jax.nn.sigmoid(gates[:, 3 * H:])
            c_new = f * c[l] + i * g
            h_new = o * jnp.tanh(c_new)
            hs.append(h_new)
            cs.append(c_new)
            layer_in = h_new
        out = layer_in @ p["w_fc"] + p["b_fc"]
        return out, jnp.stack(hs), jnp.stack(cs)

    outs = []
    prev, h, c = prev0, h0, c0
    for t in range(x_seq.shape[0]):
        out, h, c = step(x_seq[t], prev, h, c)
        outs.append(out)
        prev = out
    return jnp.stack(outs), h, c


if __name__ == "__main__":
    key = jax.random.PRNGKey(0)
    k_p, k_x, k_prev, k_h, k_c = jax.random.split(key, 5)

    D = H = O = LSTM_NEUROES
    params = init_params(k_p, D, H, O, NUM_LAYERS)
    packed = pack_params(params, D, H, O, NUM_LAYERS)   # done once, cached

    x_seq = jax.random.normal(k_x, (SEQ_STEPS, BATCH, D), jnp.float32)
    prev_output = jax.random.normal(k_prev, (BATCH, O), jnp.float32)
    h0 = jax.random.normal(k_h, (NUM_LAYERS, BATCH, H), jnp.float32)
    c0 = jax.random.normal(k_c, (NUM_LAYERS, BATCH, H), jnp.float32)

    out_seq, h_fin, c_fin = jax.block_until_ready(
        lstm_decode(x_seq, prev_output, h0, c0, packed))

    ref_out, ref_h, ref_c = _reference_decode(x_seq, prev_output, h0, c0, params)
    assert jnp.allclose(out_seq, ref_out, atol=1e-4, rtol=1e-4), "out mismatch"
    assert jnp.allclose(h_fin, ref_h, atol=1e-4, rtol=1e-4), "h mismatch"
    assert jnp.allclose(c_fin, ref_c, atol=1e-4, rtol=1e-4), "c mismatch"

    print("KERNEL_OK")
</pallas_src>

<mosaic_0001>
module attributes {stable_mosaic.version = 11 : i64} {
  func.func @_lstm_decode_kernel(%arg0: i32, %arg1: memref<1x2x32xf32, #tpu.memory_space<vmem>>, %arg2: memref<5x2x32xf32, #tpu.memory_space<vmem>>, %arg3: memref<2x64x128xf32, #tpu.memory_space<vmem>>, %arg4: memref<3x32x32xf32, #tpu.memory_space<vmem>>, %arg5: memref<4x128xf32, #tpu.memory_space<vmem>>, %arg6: memref<1x2x160xf32, #tpu.memory_space<vmem>>, %arg7: memref<2x2x32xf32, #tpu.memory_space<vmem>>, %arg8: memref<2x2x32xf32, #tpu.memory_space<vmem>>, %arg9: memref<2x32xf32, #tpu.memory_space<vmem>>) attributes {dimension_semantics = [#tpu.dimension_semantics<arbitrary>], iteration_bounds = array<i64: 8>, scalar_prefetch = 0 : i64, scratch_operands = 3 : i64, tpu.core_type = #tpu.core_type<tc>, window_params = [{transform_indices = @transform_0, window_bounds = array<i64: 1, 2, 32>}, {pipeline_mode = #tpu.pipeline_mode<synchronous>, transform_indices = @transform_1, window_bounds = array<i64: 5, 2, 32>}, {pipeline_mode = #tpu.pipeline_mode<synchronous>, transform_indices = @transform_2, window_bounds = array<i64: 2, 64, 128>}, {pipeline_mode = #tpu.pipeline_mode<synchronous>, transform_indices = @transform_3, window_bounds = array<i64: 3, 32, 32>}, {pipeline_mode = #tpu.pipeline_mode<synchronous>, transform_indices = @transform_4, window_bounds = array<i64: 4, 128>}, {transform_indices = @transform_5, window_bounds = array<i64: 1, 2, 160>}]} {
    %c0_i32 = arith.constant 0 : i32
    %0 = arith.cmpi eq, %arg0, %c0_i32 : i32
    %1 = arith.extui %0 : i1 to i32
    %c0_i32_0 = arith.constant 0 : i32
    %2 = arith.cmpi ne, %1, %c0_i32_0 : i32
    scf.if %2 {
      %c0_79 = arith.constant 0 : index
      %c0_80 = arith.constant 0 : index
      %c0_81 = arith.constant 0 : index
      %105 = vector.load %arg2[%c0_79, %c0_80, %c0_81] : memref<5x2x32xf32, #tpu.memory_space<vmem>>, vector<1x2x32xf32>
      %106 = vector.shape_cast %105 : vector<1x2x32xf32> to vector<2x32xf32>
      %c0_82 = arith.constant 0 : index
      %c0_83 = arith.constant 0 : index
      %107 = vector.load %arg9[%c0_82, %c0_83] : memref<2x32xf32, #tpu.memory_space<vmem>>, vector<2x32xf32>
      tpu.vector_store %arg9[%c0_82, %c0_83], %106 {strides = array<i32>} : memref<2x32xf32, #tpu.memory_space<vmem>>, vector<2x32xf32>,
      %c1_84 = arith.constant 1 : index
      %c0_85 = arith.constant 0 : index
      %c0_86 = arith.constant 0 : index
      %108 = vector.load %arg2[%c1_84, %c0_85, %c0_86] : memref<5x2x32xf32, #tpu.memory_space<vmem>>, vector<2x2x32xf32>
      %c0_87 = arith.constant 0 : index
      %c0_88 = arith.constant 0 : index
      %c0_89 = arith.constant 0 : index
      %109 = vector.load %arg7[%c0_87, %c0_88, %c0_89] : memref<2x2x32xf32, #tpu.memory_space<vmem>>, vector<2x2x32xf32>
      tpu.vector_store %arg7[%c0_87, %c0_88, %c0_89], %108 {strides = array<i32>} : memref<2x2x32xf32, #tpu.memory_space<vmem>>, vector<2x2x32xf32>,
      %c3_90 = arith.constant 3 : index
      %c0_91 = arith.constant 0 : index
      %c0_92 = arith.constant 0 : index
      %110 = vector.load %arg2[%c3_90, %c0_91, %c0_92] : memref<5x2x32xf32, #tpu.memory_space<vmem>>, vector<2x2x32xf32>
      %c0_93 = arith.constant 0 : index
      %c0_94 = arith.constant 0 : index
      %c0_95 = arith.constant 0 : index
      %111 = vector.load %arg8[%c0_93, %c0_94, %c0_95] : memref<2x2x32xf32, #tpu.memory_space<vmem>>, vector<2x2x32xf32>
      tpu.vector_store %arg8[%c0_93, %c0_94, %c0_95], %110 {strides = array<i32>} : memref<2x2x32xf32, #tpu.memory_space<vmem>>, vector<2x2x32xf32>,
    } else {
    }
    %c0 = arith.constant 0 : index
    %c0_1 = arith.constant 0 : index
    %c0_2 = arith.constant 0 : index
    %3 = vector.load %arg1[%c0, %c0_1, %c0_2] : memref<1x2x32xf32, #tpu.memory_space<vmem>>, vector<1x2x32xf32>
    %4 = vector.shape_cast %3 : vector<1x2x32xf32> to vector<2x32xf32>
    %c0_3 = arith.constant 0 : index
    %c0_4 = arith.constant 0 : index
    %5 = vector.load %arg9[%c0_3, %c0_4] : memref<2x32xf32, #tpu.memory_space<vmem>>, vector<2x32xf32>
    %c0_5 = arith.constant 0 : index
    %c0_6 = arith.constant 0 : index
    %c0_7 = arith.constant 0 : index
    %6 = vector.load %arg4[%c0_5, %c0_6, %c0_7] : memref<3x32x32xf32, #tpu.memory_space<vmem>>, vector<1x32x32xf32>
    %7 = vector.shape_cast %6 : vector<1x32x32xf32> to vector<32x32xf32>
    %cst = arith.constant dense<0.000000e+00> : vector<2x32xf32>
    %8 = tpu.matmul %4, %7, %cst {dimension_numbers = #tpu.dot_dimension_numbers<[1], [0], [0], [1], [0, 0, 1, 1], [], []>} : vector<2x32xf32>, vector<32x32xf32>, vector<2x32xf32> -> vector<2x32xf32>
    %c1 = arith.constant 1 : index
    %c0_8 = arith.constant 0 : index
    %c0_9 = arith.constant 0 : index
    %9 = vector.load %arg4[%c1, %c0_8, %c0_9] : memref<3x32x32xf32, #tpu.memory_space<vmem>>, vector<1x32x32xf32>
    %10 = vector.shape_cast %9 : vector<1x32x32xf32> to vector<32x32xf32>
    %cst_10 = arith.constant dense<0.000000e+00> : vector<2x32xf32>
    %11 = tpu.matmul %5, %10, %cst_10 {dimension_numbers = #tpu.dot_dimension_numbers<[1], [0], [0], [1], [0, 0, 1, 1], [], []>} : vector<2x32xf32>, vector<32x32xf32>, vector<2x32xf32> -> vector<2x32xf32>
    %12 = arith.addf %8, %11 : vector<2x32xf32>
    %c2 = arith.constant 2 : index
    %c0_11 = arith.constant 0 : index
    %13 = vector.load %arg5[%c2, %c0_11] : memref<4x128xf32, #tpu.memory_space<vmem>>, vector<1x32xf32>
    %14 = vector.broadcast %13 : vector<1x32xf32> to vector<2x32xf32>
    %15 = arith.addf %12, %14 : vector<2x32xf32>
    %c0_12 = arith.constant 0 : index
    %c0_13 = arith.constant 0 : index
    %c0_14 = arith.constant 0 : index
    %16 = vector.load %arg7[%c0_12, %c0_13, %c0_14] : memref<2x2x32xf32, #tpu.memory_space<vmem>>, vector<1x2x32xf32>
    %17 = vector.shape_cast %16 : vector<1x2x32xf32> to vector<2x32xf32>
    %c0_15 = arith.constant 0 : index
    %c32 = arith.constant 32 : index
    %c0_16 = arith.constant 0 : index
    %18 = vector.load %arg3[%c0_15, %c32, %c0_16] : memref<2x64x128xf32, #tpu.memory_space<vmem>>, vector<1x32x128xf32>
    %19 = vector.shape_cast %18 : vector<1x32x128xf32> to vector<32x128xf32>
    %cst_17 = arith.constant dense<0.000000e+00> : vector<2x128xf32>
    %20 = tpu.matmul %17, %19, %cst_17 {dimension_numbers = #tpu.dot_dimension_numbers<[1], [0], [0], [1], [0, 0, 1, 1], [], []>} : vector<2x32xf32>, vector<32x128xf32>, vector<2x128xf32> -> vector<2x128xf32>
    %c1_18 = arith.constant 1 : index
    %c0_19 = arith.constant 0 : index
    %c0_20 = arith.constant 0 : index
    %21 = vector.load %arg7[%c1_18, %c0_19, %c0_20] : memref<2x2x32xf32, #tpu.memory_space<vmem>>, vector<1x2x32xf32>
    %22 = vector.shape_cast %21 : vector<1x2x32xf32> to vector<2x32xf32>
    %c1_21 = arith.constant 1 : index
    %c32_22 = arith.constant 32 : index
    %c0_23 = arith.constant 0 : index
    %23 = vector.load %arg3[%c1_21, %c32_22, %c0_23] : memref<2x64x128xf32, #tpu.memory_space<vmem>>, vector<1x32x128xf32>
    %24 = vector.shape_cast %23 : vector<1x32x128xf32> to vector<32x128xf32>
    %cst_24 = arith.constant dense<0.000000e+00> : vector<2x128xf32>
    %25 = tpu.matmul %22, %24, %cst_24 {dimension_numbers = #tpu.dot_dimension_numbers<[1], [0], [0], [1], [0, 0, 1, 1], [], []>} : vector<2x32xf32>, vector<32x128xf32>, vector<2x128xf32> -> vector<2x128xf32>
    %c0_25 = arith.constant 0 : index
    %c0_26 = arith.constant 0 : index
    %c0_27 = arith.constant 0 : index
    %26 = vector.load %arg3[%c0_25, %c0_26, %c0_27] : memref<2x64x128xf32, #tpu.memory_space<vmem>>, vector<1x32x128xf32>
    %27 = vector.shape_cast %26 : vector<1x32x128xf32> to vector<32x128xf32>
    %cst_28 = arith.constant dense<0.000000e+00> : vector<2x128xf32>
    %28 = tpu.matmul %15, %27, %cst_28 {dimension_numbers = #tpu.dot_dimension_numbers<[1], [0], [0], [1], [0, 0, 1, 1], [], []>} : vector<2x32xf32>, vector<32x128xf32>, vector<2x128xf32> -> vector<2x128xf32>
    %29 = arith.addf %28, %20 : vector<2x128xf32>
    %c0_29 = arith.constant 0 : index
    %c0_30 = arith.constant 0 : index
    %30 = vector.load %arg5[%c0_29, %c0_30] : memref<4x128xf32, #tpu.memory_space<vmem>>, vector<1x128xf32>
    %31 = vector.broadcast %30 : vector<1x128xf32> to vector<2x128xf32>
    %32 = arith.addf %29, %31 : vector<2x128xf32>
    %33 = arith.negf %32 : vector<2x128xf32>
    %34 = math.exp %33 : vector<2x128xf32>
    %cst_31 = arith.constant 1.000000e+00 : f32
    %35 = vector.broadcast %cst_31 : f32 to vector<2x128xf32>
    %36 = arith.addf %35, %34 : vector<2x128xf32>
    %37 = arith.divf %35, %36 : vector<2x128xf32>
    %38 = math.tanh %32 : vector<2x128xf32>
    %39 = vector.extract_strided_slice %37 {offsets = [0, 0], sizes = [2, 32], strides = [1, 1]} : vector<2x128xf32> to vector<2x32xf32>
    %40 = vector.extract_strided_slice %37 {offsets = [0, 32], sizes = [2, 32], strides = [1, 1]} : vector<2x128xf32> to vector<2x32xf32>
    %41 = vector.extract_strided_slice %38 {offsets = [0, 64], sizes = [2, 32], strides = [1, 1]} : vector<2x128xf32> to vector<2x32xf32>
    %42 = vector.extract_strided_slice %37 {offsets = [0, 96], sizes = [2, 32], strides = [1, 1]} : vector<2x128xf32> to vector<2x32xf32>
    %c0_32 = arith.constant 0 : index
    %c0_33 = arith.constant 0 : index
    %c0_34 = arith.constant 0 : index
    %43 = vector.load %arg8[%c0_32, %c0_33, %c0_34] : memref<2x2x32xf32, #tpu.memory_space<vmem>>, vector<1x2x32xf32>
    %44 = vector.shape_cast %43 : vector<1x2x32xf32> to vector<2x32xf32>
    %45 = arith.mulf %40, %44 : vector<2x32xf32>
    %46 = arith.mulf %39, %41 : vector<2x32xf32>
    %47 = arith.addf %45, %46 : vector<2x32xf32>
    %48 = math.tanh %47 : vector<2x32xf32>
    %49 = arith.mulf %42, %48 : vector<2x32xf32>
    %c0_35 = arith.constant 0 : index
    %c0_36 = arith.constant 0 : index
    %c0_37 = arith.constant 0 : index
    %50 = vector.load %arg7[%c0_35, %c0_36, %c0_37] : memref<2x2x32xf32, #tpu.memory_space<vmem>>, vector<1x2x32xf32>
    %51 = vector.shape_cast %50 : vector<1x2x32xf32> to vector<2x32xf32>
    %52 = vector.shape_cast %49 : vector<2x32xf32> to vector<1x2x32xf32>
    tpu.vector_store %arg7[%c0_35, %c0_36, %c0_37], %52 {strides = array<i32>} : memref<2x2x32xf32, #tpu.memory_space<vmem>>, vector<1x2x32xf32>,
    %c0_38 = arith.constant 0 : index
    %c0_39 = arith.constant 0 : index
    %c0_40 = arith.constant 0 : index
    %53 = vector.load %arg8[%c0_38, %c0_39, %c0_40] : memref<2x2x32xf32, #tpu.memory_space<vmem>>, vector<1x2x32xf32>
    %54 = vector.shape_cast %53 : vector<1x2x32xf32> to vector<2x32xf32>
    %55 = vector.shape_cast %47 : vector<2x32xf32> to vector<1x2x32xf32>
    tpu.vector_store %arg8[%c0_38, %c0_39, %c0_40], %55 {strides = array<i32>} : memref<2x2x32xf32, #tpu.memory_space<vmem>>, vector<1x2x32xf32>,
    %c1_41 = arith.constant 1 : index
    %c0_42 = arith.constant 0 : index
    %c0_43 = arith.constant 0 : index
    %56 = vector.load %arg3[%c1_41, %c0_42, %c0_43] : memref<2x64x128xf32, #tpu.memory_space<vmem>>, vector<1x32x128xf32>
    %57 = vector.shape_cast %56 : vector<1x32x128xf32> to vector<32x128xf32>
    %cst_44 = arith.constant dense<0.000000e+00> : vector<2x128xf32>
    %58 = tpu.matmul %49, %57, %cst_44 {dimension_numbers = #tpu.dot_dimension_numbers<[1], [0], [0], [1], [0, 0, 1, 1], [], []>} : vector<2x32xf32>, vector<32x128xf32>, vector<2x128xf32> -> vector<2x128xf32>
    %59 = arith.addf %58, %25 : vector<2x128xf32>
    %c1_45 = arith.constant 1 : index
    %c0_46 = arith.constant 0 : index
    %60 = vector.load %arg5[%c1_45, %c0_46] : memref<4x128xf32, #tpu.memory_space<vmem>>, vector<1x128xf32>
    %61 = vector.broadcast %60 : vector<1x128xf32> to vector<2x128xf32>
    %62 = arith.addf %59, %61 : vector<2x128xf32>
    %63 = arith.negf %62 : vector<2x128xf32>
    %64 = math.exp %63 : vector<2x128xf32>
    %cst_47 = arith.constant 1.000000e+00 : f32
    %65 = vector.broadcast %cst_47 : f32 to vector<2x128xf32>
    %66 = arith.addf %65, %64 : vector<2x128xf32>
    %67 = arith.divf %65, %66 : vector<2x128xf32>
    %68 = math.tanh %62 : vector<2x128xf32>
    %69 = vector.extract_strided_slice %67 {offsets = [0, 0], sizes = [2, 32], strides = [1, 1]} : vector<2x128xf32> to vector<2x32xf32>
    %70 = vector.extract_strided_slice %67 {offsets = [0, 32], sizes = [2, 32], strides = [1, 1]} : vector<2x128xf32> to vector<2x32xf32>
    %71 = vector.extract_strided_slice %68 {offsets = [0, 64], sizes = [2, 32], strides = [1, 1]} : vector<2x128xf32> to vector<2x32xf32>
    %72 = vector.extract_strided_slice %67 {offsets = [0, 96], sizes = [2, 32], strides = [1, 1]} : vector<2x128xf32> to vector<2x32xf32>
    %c1_48 = arith.constant 1 : index
    %c0_49 = arith.constant 0 : index
    %c0_50 = arith.constant 0 : index
    %73 = vector.load %arg8[%c1_48, %c0_49, %c0_50] : memref<2x2x32xf32, #tpu.memory_space<vmem>>, vector<1x2x32xf32>
    %74 = vector.shape_cast %73 : vector<1x2x32xf32> to vector<2x32xf32>
    %75 = arith.mulf %70, %74 : vector<2x32xf32>
    %76 = arith.mulf %69, %71 : vector<2x32xf32>
    %77 = arith.addf %75, %76 : vector<2x32xf32>
    %78 = math.tanh %77 : vector<2x32xf32>
    %79 = arith.mulf %72, %78 : vector<2x32xf32>
    %c1_51 = arith.constant 1 : index
    %c0_52 = arith.constant 0 : index
    %c0_53 = arith.constant 0 : index
    %80 = vector.load %arg7[%c1_51, %c0_52, %c0_53] : memref<2x2x32xf32, #tpu.memory_space<vmem>>, vector<1x2x32xf32>
    %81 = vector.shape_cast %80 : vector<1x2x32xf32> to vector<2x32xf32>
    %82 = vector.shape_cast %79 : vector<2x32xf32> to vector<1x2x32xf32>
    tpu.vector_store %arg7[%c1_51, %c0_52, %c0_53], %82 {strides = array<i32>} : memref<2x2x32xf32, #tpu.memory_space<vmem>>, vector<1x2x32xf32>,
    %c1_54 = arith.constant 1 : index
    %c0_55 = arith.constant 0 : index
    %c0_56 = arith.constant 0 : index
    %83 = vector.load %arg8[%c1_54, %c0_55, %c0_56] : memref<2x2x32xf32, #tpu.memory_space<vmem>>, vector<1x2x32xf32>
    %84 = vector.shape_cast %83 : vector<1x2x32xf32> to vector<2x32xf32>
    %85 = vector.shape_cast %77 : vector<2x32xf32> to vector<1x2x32xf32>
    tpu.vector_store %arg8[%c1_54, %c0_55, %c0_56], %85 {strides = array<i32>} : memref<2x2x32xf32, #tpu.memory_space<vmem>>, vector<1x2x32xf32>,
    %c2_57 = arith.constant 2 : index
    %c0_58 = arith.constant 0 : index
    %c0_59 = arith.constant 0 : index
    %86 = vector.load %arg4[%c2_57, %c0_58, %c0_59] : memref<3x32x32xf32, #tpu.memory_space<vmem>>, vector<1x32x32xf32>
    %87 = vector.shape_cast %86 : vector<1x32x32xf32> to vector<32x32xf32>
    %cst_60 = arith.constant dense<0.000000e+00> : vector<2x32xf32>
    %88 = tpu.matmul %79, %87, %cst_60 {dimension_numbers = #tpu.dot_dimension_numbers<[1], [0], [0], [1], [0, 0, 1, 1], [], []>} : vector<2x32xf32>, vector<32x32xf32>, vector<2x32xf32> -> vector<2x32xf32>
    %c3 = arith.constant 3 : index
    %c0_61 = arith.constant 0 : index
    %89 = vector.load %arg5[%c3, %c0_61] : memref<4x128xf32, #tpu.memory_space<vmem>>, vector<1x32xf32>
    %90 = vector.broadcast %89 : vector<1x32xf32> to vector<2x32xf32>
    %91 = arith.addf %88, %90 : vector<2x32xf32>
    %c0_62 = arith.constant 0 : index
    %c0_63 = arith.constant 0 : index
    %92 = vector.load %arg9[%c0_62, %c0_63] : memref<2x32xf32, #tpu.memory_space<vmem>>, vector<2x32xf32>
    tpu.vector_store %arg9[%c0_62, %c0_63], %91 {strides = array<i32>} : memref<2x32xf32, #tpu.memory_space<vmem>>, vector<2x32xf32>,
    %c0_64 = arith.constant 0 : index
    %c0_65 = arith.constant 0 : index
    %c0_66 = arith.constant 0 : index
    %93 = vector.load %arg7[%c0_64, %c0_65, %c0_66] : memref<2x2x32xf32, #tpu.memory_space<vmem>>, vector<1x2x32xf32>
    %94 = vector.shape_cast %93 : vector<1x2x32xf32> to vector<2x32xf32>
    %c1_67 = arith.constant 1 : index
    %c0_68 = arith.constant 0 : index
    %c0_69 = arith.constant 0 : index
    %95 = vector.load %arg7[%c1_67, %c0_68, %c0_69] : memref<2x2x32xf32, #tpu.memory_space<vmem>>, vector<1x2x32xf32>
    %96 = vector.shape_cast %95 : vector<1x2x32xf32> to vector<2x32xf32>
    %c0_70 = arith.constant 0 : index
    %c0_71 = arith.constant 0 : index
    %c0_72 = arith.constant 0 : index
    %97 = vector.load %arg8[%c0_70, %c0_71, %c0_72] : memref<2x2x32xf32, #tpu.memory_space<vmem>>, vector<1x2x32xf32>
    %98 = vector.shape_cast %97 : vector<1x2x32xf32> to vector<2x32xf32>
    %c1_73 = arith.constant 1 : index
    %c0_74 = arith.constant 0 : index
    %c0_75 = arith.constant 0 : index
    %99 = vector.load %arg8[%c1_73, %c0_74, %c0_75] : memref<2x2x32xf32, #tpu.memory_space<vmem>>, vector<1x2x32xf32>
    %100 = vector.shape_cast %99 : vector<1x2x32xf32> to vector<2x32xf32>
    %101 = tpu.concatenate %91, %94, %96, %98, %100 in 1 : vector<2x32xf32>, vector<2x32xf32>, vector<2x32xf32>, vector<2x32xf32>, vector<2x32xf32> -> vector<2x160xf32>
    %c0_76 = arith.constant 0 : index
    %c0_77 = arith.constant 0 : index
    %c0_78 = arith.constant 0 : index
    %102 = vector.load %arg6[%c0_76, %c0_77, %c0_78] : memref<1x2x160xf32, #tpu.memory_space<vmem>>, vector<1x2x160xf32>
    %103 = vector.shape_cast %102 : vector<1x2x160xf32> to vector<2x160xf32>
    %104 = vector.shape_cast %101 : vector<2x160xf32> to vector<1x2x160xf32>
    tpu.vector_store %arg6[%c0_76, %c0_77, %c0_78], %104 {strides = array<i32>} : memref<1x2x160xf32, #tpu.memory_space<vmem>>, vector<1x2x160xf32>,
    return
  }
  func.func @transform_0(%arg0: i32) -> (i32, i32, i32) {
    %c0_i32 = arith.constant 0 : i32
    %c0_i32_0 = arith.constant 0 : i32
    %c0_i32_1 = arith.constant 0 : i32
    return %arg0, %c0_i32, %c0_i32_0 : i32, i32, i32
  }
  func.func @transform_1(%arg0: i32) -> (i32, i32, i32) {
    %c0_i32 = arith.constant 0 : i32
    %c0_i32_0 = arith.constant 0 : i32
    %c0_i32_1 = arith.constant 0 : i32
    %c0_i32_2 = arith.constant 0 : i32
    return %c0_i32, %c0_i32_0, %c0_i32_1 : i32, i32, i32
  }
  func.func @transform_2(%arg0: i32) -> (i32, i32, i32) {
    %c0_i32 = arith.constant 0 : i32
    %c0_i32_0 = arith.constant 0 : i32
    %c0_i32_1 = arith.constant 0 : i32
    %c0_i32_2 = arith.constant 0 : i32
    return %c0_i32, %c0_i32_0, %c0_i32_1 : i32, i32, i32
  }
  func.func @transform_3(%arg0: i32) -> (i32, i32, i32) {
    %c0_i32 = arith.constant 0 : i32
    %c0_i32_0 = arith.constant 0 : i32
    %c0_i32_1 = arith.constant 0 : i32
    %c0_i32_2 = arith.constant 0 : i32
    return %c0_i32, %c0_i32_0, %c0_i32_1 : i32, i32, i32
  }
  func.func @transform_4(%arg0: i32) -> (i32, i32) {
    %c0_i32 = arith.constant 0 : i32
    %c0_i32_0 = arith.constant 0 : i32
    %c0_i32_1 = arith.constant 0 : i32
    return %c0_i32, %c0_i32_0 : i32, i32
  }
  func.func @transform_5(%arg0: i32) -> (i32, i32, i32) {
    %c0_i32 = arith.constant 0 : i32
    %c0_i32_0 = arith.constant 0 : i32
    %c0_i32_1 = arith.constant 0 : i32
    return %arg0, %c0_i32, %c0_i32_0 : i32, i32, i32
  }
}

</mosaic_0001>

<llo_original>
// kernel: squeeze.3
$region0: #{squeeze.3}
  %s0 = inlined_call_operand.vmem [shape: f32[1,2,64], index: 0, kind: input, shape index: {}]
  %s1 = inlined_call_operand.vmem [shape: f32[2,2,32], index: 1, kind: output, shape index: {}]
  $region1: #{squeeze.3} parent=0
    #allocation0 [shape = 'u8[8192]{0}', space=vmem, size = 0x2000, scoped, tag = 'scoped mem for output reshape']
    #allocation1 [shape = 'u8[4096]{0}', space=vmem, size = 0x1000, scoped, tag = 'scoped mem for input reshape']
    %s3 = sshllo.u32 0, 2
    %v4 = vld [vmem:[%s0] sm:%s3]
    %5 = vst [vmem:[#allocation1] sm:%s3] %v4
    %v6 = vld [vmem:[#allocation1] sm:$0x3]
    %vm7 = vcmask 261120
    %8 = vst.msk [vmem:[#allocation0] ss:$8 sm:$0x3] %vm7, %v6
    %v9 = vld [vmem:[#allocation1] sm:$0x3]
    %10 = vrot.lane.b32.xlu0 %v9, 96
    %v11 = vpop.permute.xlu0 %10
    %vm12 = vcmask 261120
    %s13 = scalar_lea.vmem [#allocation0], 1
    %14 = vst.msk [vmem:[%s13] ss:$8 sm:$0x3] %vm12, %v11
    %s16 = sshllo.u32 0, 2
    %v18 = vld [vmem:[#allocation0] sm:%s16]
    %s19 = sshllo.u32 0, 2
    %20 = vst [vmem:[%s1] sm:%s19] %v18
    %s21 = scalar_lea.vmem [#allocation0], 8
    %v22 = vld [vmem:[%s21] sm:%s16]
    %s23 = sshllo.u32 0, 2
    %s24 = scalar_lea.vmem %s1, 2
    %25 = vst [vmem:[%s24] sm:%s23] %v22

// kernel: lstm_decode.1
$region0: #{lstm_decode.1}
  #allocation0 [shape = 'u32[]', space=smem, size = 0x4, offset = 0x4, fixed_abs, tag = 'smem constant byte address 0x4 - core index']
  #allocation1 [shape = 'u32[144,128]{1,0:T(1,128)}', space=vmem, size = 0x12000, scoped, tag = 'internal scratch']
  #allocation2 [shape = 'f32[2,2,32]{2,1,0:T(2,128)}', space=vmem, size = 0x800, scoped, tag = 'scratch operand']
  #allocation3 [shape = 'f32[2,2,32]{2,1,0:T(2,128)}', space=vmem, size = 0x800, scoped, tag = 'scratch operand']
  #allocation4 [shape = 'f32[2,32]{1,0:T(2,128)}', space=vmem, size = 0x400, scoped, tag = 'scratch operand']
  %s0 = inlined_call_operand.vmem [shape: f32[8,2,32], index: 0, kind: input, shape index: {}]
  %s1 = inlined_call_operand.vmem [shape: f32[5,2,32], index: 1, kind: input, shape index: {}]
  %s2 = inlined_call_operand.hbm [shape: f32[2,64,128], index: 2, kind: input, shape index: {}]
  %s3 = inlined_call_operand.hbm [shape: f32[3,32,32], index: 3, kind: input, shape index: {}]
  %s4 = inlined_call_operand.vmem [shape: f32[4,128], index: 4, kind: input, shape index: {}]
  %s5 = inlined_call_operand.vmem [shape: f32[8,2,160], index: 5, kind: output, shape index: {}]
  %s6 = sld [smem:[#allocation0]]
  $region65: #{lstm_decode.1} parent=0
    _
  %s8 = ssub.s32 1, %s6
  %s9 = scalar_select 0, %s8, %s6
  $region1: #{lstm_decode.1} parent=0
    #allocation5 [shape = 'u8[65536]{0}', space=vmem, size = 0x10000, scoped, tag = 'input window, operand 2, single buffered']
    #allocation6 [shape = 's32[2]{0}', space=sflag, size = 0x8, scoped, tag = 'scoped memory for lstm_decode.1']
    #allocation7 [shape = 'u8[49152]{0}', space=vmem, size = 0xc000, scoped, tag = 'input window, operand 3, single buffered']
    #allocation8 [shape = 's32[1]{0}', space=sflag, size = 0x4, scoped, tag = 'scoped memory for lstm_decode.1']
    %10 = vsyncpa [#allocation6], 0
    %11 = vsyncpa [#allocation8], 0
    loop: start=0, step=1, limit=10
    $region2: #{lstm_decode.1} parent=1 // loop_pre_header
      _
    $region3: #{lstm_decode.1} parent=1 // loop_header
      %s13 = sphi 0, %s17
      %p14 = scmp.ge.s32.totalorder %s13, 10
      %s23 = sphi 0, %s25
      %s26 = sphi 0, %s23
      %s27 = sphi 0, %s26
      %s43 = sphi 0, %s27
      %s47 = sphi 0, %s47
      %s49 = sphi 0, %s47
      %s50 = sphi 0, %s49
      %s64 = sphi 0, %s50
      %s68 = sphi 0, %s68
      %s70 = sphi 0, %s68
      %s71 = sphi 0, %s70
      %s85 = sphi 0, %s71
      %s89 = sphi 0, %s89
      %s91 = sphi 0, %s89
      %s92 = sphi 0, %s91
      %s106 = sphi 0, %s92
      %s110 = sphi 0, %s110
      %s112 = sphi 0, %s110
      %s113 = sphi 0, %s112
      %s127 = sphi 0, %s113
      %s133 = sphi 0, %s135
      %s136 = sphi 0, %s133
      %s137 = sphi 0, %s136
      %s153 = sphi 0, %s137
    $region4: #{lstm_decode.1} parent=1 // loop_header_branch
      %16 = sbr.rel (%p14) target = $region8
    $region5: #{lstm_decode.1} parent=1 // loop_body
      %s18 = ssub.s32 %s13, 1
      %s19 = ssub.s32 %s13, 2
      %s20 = sadd.s32 %s13, 1
      %s21 = ssub.s32 %s13, %s20
      %p22 = scmp.eq.s32.totalorder %s21, 0
      %s24 = sadd.s32 %s23, 1
      %s25 = scalar_select %p22, %s23, %s24
      %p28 = pneg %p22
      %p29 = scmp.eq.s32.totalorder %s13, 7
      %p30 = por %p28, %p29
      %p31 = scmp.ne.s32.totalorder %s23, %s26
      %p32 = scmp.eq.s32.totalorder %s13, 0
      %p33 = por %p31, %p32
      %p34 = scmp.ne.s32.totalorder %s23, %s26
      %p35 = scmp.eq.s32.totalorder %s18, 7
      %p36 = por %p34, %p35
      %p37 = scmp.ne.s32.totalorder %s26, %s27
      %p38 = scmp.eq.s32.totalorder %s18, 0
      %p39 = por %p37, %p38
      %p40 = scmp.ne.s32.totalorder %s26, %s27
      %p41 = scmp.eq.s32.totalorder %s19, 7
      %p42 = por %p40, %p41
      %p44 = scmp.ne.s32.totalorder %s27, %s43
      %p45 = scmp.eq.s32.totalorder %s19, 0
      %p46 = por %p44, %p45
      %s48 = sadd.s32 %s47, 1
      %p51 = scmp.eq.s32.totalorder %s13, 7
      %p52 = scmp.ne.s32.totalorder %s47, %s49
      %p53 = scmp.eq.s32.totalorder %s13, 0
      %p54 = por %p52, %p53
      %p55 = scmp.ne.s32.totalorder %s47, %s49
      %p56 = scmp.eq.s32.totalorder %s18, 7
      %p57 = por %p55, %p56
      %p58 = scmp.ne.s32.totalorder %s49, %s50
      %p59 = scmp.eq.s32.totalorder %s18, 0
      %p60 = por %p58, %p59
      %p61 = scmp.ne.s32.totalorder %s49, %s50
      %p62 = scmp.eq.s32.totalorder %s19, 7
      %p63 = por %p61, %p62
      %p65 = scmp.ne.s32.totalorder %s50, %s64
      %p66 = scmp.eq.s32.totalorder %s19, 0
      %p67 = por %p65, %p66
      %s69 = sadd.s32 %s68, 1
      %p72 = scmp.eq.s32.totalorder %s13, 7
      %p73 = scmp.ne.s32.totalorder %s68, %s70
      %p74 = scmp.eq.s32.totalorder %s13, 0
      %p75 = por %p73, %p74
      %p76 = scmp.ne.s32.totalorder %s68, %s70
      %p77 = scmp.eq.s32.totalorder %s18, 7
      %p78 = por %p76, %p77
      %p79 = scmp.ne.s32.totalorder %s70, %s71
      %p80 = scmp.eq.s32.totalorder %s18, 0
      %p81 = por %p79, %p80
      %p82 = scmp.ne.s32.totalorder %s70, %s71
      %p83 = scmp.eq.s32.totalorder %s19, 7
      %p84 = por %p82, %p83
      %p86 = scmp.ne.s32.totalorder %s71, %s85
      %p87 = scmp.eq.s32.totalorder %s19, 0
      %p88 = por %p86, %p87
      %s90 = sadd.s32 %s89, 1
      %p93 = scmp.eq.s32.totalorder %s13, 7
      %p94 = scmp.ne.s32.totalorder %s89, %s91
      %p95 = scmp.eq.s32.totalorder %s13, 0
      %p96 = por %p94, %p95
      %p97 = scmp.ne.s32.totalorder %s89, %s91
      %p98 = scmp.eq.s32.totalorder %s18, 7
      %p99 = por %p97, %p98
      %p100 = scmp.ne.s32.totalorder %s91, %s92
      %p101 = scmp.eq.s32.totalorder %s18, 0
      %p102 = por %p100, %p101
      %p103 = scmp.ne.s32.totalorder %s91, %s92
      %p104 = scmp.eq.s32.totalorder %s19, 7
      %p105 = por %p103, %p104
      %p107 = scmp.ne.s32.totalorder %s92, %s106
      %p108 = scmp.eq.s32.totalorder %s19, 0
      %p109 = por %p107, %p108
      %s111 = sadd.s32 %s110, 1
      %p114 = scmp.eq.s32.totalorder %s13, 7
      %p115 = scmp.ne.s32.totalorder %s110, %s112
      %p116 = scmp.eq.s32.totalorder %s13, 0
      %p117 = por %p115, %p116
      %p118 = scmp.ne.s32.totalorder %s110, %s112
      %p119 = scmp.eq.s32.totalorder %s18, 7
      %p120 = por %p118, %p119
      %p121 = scmp.ne.s32.totalorder %s112, %s113
      %p122 = scmp.eq.s32.totalorder %s18, 0
      %p123 = por %p121, %p122
      %p124 = scmp.ne.s32.totalorder %s112, %s113
      %p125 = scmp.eq.s32.totalorder %s19, 7
      %p126 = por %p124, %p125
      %p128 = scmp.ne.s32.totalorder %s113, %s127
      %p129 = scmp.eq.s32.totalorder %s19, 0
      %p130 = por %p128, %p129
      %s131 = ssub.s32 %s13, %s20
      %p132 = scmp.eq.s32.totalorder %s131, 0
      %s134 = sadd.s32 %s133, 1
      %s135 = scalar_select %p132, %s133, %s134
      %p138 = pneg %p132
      %p139 = scmp.eq.s32.totalorder %s13, 7
      %p140 = por %p138, %p139
      %p141 = scmp.ne.s32.totalorder %s133, %s136
      %p142 = scmp.eq.s32.totalorder %s13, 0
      %p143 = por %p141, %p142
      %p144 = scmp.ne.s32.totalorder %s133, %s136
      %p145 = scmp.eq.s32.totalorder %s18, 7
      %p146 = por %p144, %p145
      %p147 = scmp.ne.s32.totalorder %s136, %s137
      %p148 = scmp.eq.s32.totalorder %s18, 0
      %p149 = por %p147, %p148
      %p150 = scmp.ne.s32.totalorder %s136, %s137
      %p151 = scmp.eq.s32.totalorder %s19, 7
      %p152 = por %p150, %p151
      %p154 = scmp.ne.s32.totalorder %s137, %s153
      %p155 = scmp.eq.s32.totalorder %s19, 0
      %p156 = por %p154, %p155
      %p157 = scmp.le.s32.totalorder 1, %s13
      %p158 = scmp.lt.s32.totalorder %s13, 9
      %p159 = pnand %p157, %p158
      %p160 = pneg %p159
      // Predicated region
      $region9: #{lstm_decode.1} parent=5 // pred_check
        _
      $region10: #{lstm_decode.1} parent=5 // pred_check_branch
        %162 = sbr.rel (%p159) target = $region12
      $region11: #{lstm_decode.1} parent=5 // pred_region
        %s163 = ssub.s32 %s13, 1
        // Predicated region
        $region13: #{lstm_decode.1} parent=11 // pred_check
          %p164 = pneg %p60
        $region14: #{lstm_decode.1} parent=11 // pred_check_branch
          %166 = sbr.rel (%p164) target = $region16
        $region15: #{lstm_decode.1} parent=11 // pred_region
          _
        $region16: #{lstm_decode.1} parent=11 // pred_fallthru
          _
        // Predicated region
        $region17: #{lstm_decode.1} parent=11 // pred_check
          %p167 = pneg %p81
        $region18: #{lstm_decode.1} parent=11 // pred_check_branch
          %169 = sbr.rel (%p167) target = $region20
        $region19: #{lstm_decode.1} parent=11 // pred_region
          %s171 = ssub.s32 2048, 2048
          %172 = vsyncadd [#allocation6], %s171
          %s173 = sshll.u32 [#allocation5], 4
          %s174 = int_to_ptr.vmem [resolvable:$true] %s173
          %179 = dma.hbm_to_vmem [thread:$0]  %s2, 2048, %s174, [#allocation6], 128, 128, 8
        $region20: #{lstm_decode.1} parent=11 // pred_fallthru
          _
        // Predicated region
        $region21: #{lstm_decode.1} parent=11 // pred_check
          %p180 = pneg %p102
        $region22: #{lstm_decode.1} parent=11 // pred_check_branch
          %182 = sbr.rel (%p180) target = $region24
        $region23: #{lstm_decode.1} parent=11 // pred_region
          %s184 = ssub.s32 1536, 1536
          %185 = vsyncadd [#allocation8], %s184
          %s186 = sshll.u32 [#allocation7], 4
          %s187 = int_to_ptr.vmem [resolvable:$true] %s186
          %192 = dma.hbm_to_vmem [thread:$0]  %s3, 1536, %s187, [#allocation8], 128, 128, 8
        $region24: #{lstm_decode.1} parent=11 // pred_fallthru
          _
        // Predicated region
        $region25: #{lstm_decode.1} parent=11 // pred_check
          %p193 = pneg %p123
        $region26: #{lstm_decode.1} parent=11 // pred_check_branch
          %195 = sbr.rel (%p193) target = $region28
        $region27: #{lstm_decode.1} parent=11 // pred_region
          _
        $region28: #{lstm_decode.1} parent=11 // pred_fallthru
          _
      $region12: #{lstm_decode.1} parent=5 // pred_fallthru
        _
      %p196 = scmp.lt.s32.totalorder %s13, 8
      // Predicated region
      $region29: #{lstm_decode.1} parent=5 // pred_check
        %p197 = pneg %p196
      $region30: #{lstm_decode.1} parent=5 // pred_check_branch
        %199 = sbr.rel (%p197) target = $region32
      $region31: #{lstm_decode.1} parent=5 // pred_region
        // Predicated region
        $region33: #{lstm_decode.1} parent=31 // pred_check
          %p200 = pneg %p33
        $region34: #{lstm_decode.1} parent=31 // pred_check_branch
          %202 = sbr.rel (%p200) target = $region36
        $region35: #{lstm_decode.1} parent=31 // pred_region
          %p203 = scmp.lt.s32.totalorder %s13, 7
          %s204 = scalar_select %p203, %s13, 7
          %s205 = smul.addr %s204, 2
          %s206 = scalar_lea.vmem %s0, %s205
        $region36: #{lstm_decode.1} parent=31 // pred_fallthru
          _
      $region32: #{lstm_decode.1} parent=5 // pred_fallthru
        _
      %p207 = scmp.le.s32.totalorder 1, %s13
      %p208 = scmp.lt.s32.totalorder %s13, 9
      %p209 = pnand %p207, %p208
      %p210 = pneg %p209
      // Predicated region
      $region37: #{lstm_decode.1} parent=5 // pred_check
        _
      $region38: #{lstm_decode.1} parent=5 // pred_check_branch
        %212 = sbr.rel (%p209) target = $region40
      $region39: #{lstm_decode.1} parent=5 // pred_region
        %s213 = ssub.s32 %s13, 1
        // Predicated region
        $region41: #{lstm_decode.1} parent=39 // pred_check
          %p214 = pneg %p81
        $region42: #{lstm_decode.1} parent=39 // pred_check_branch
          %216 = sbr.rel (%p214) target = $region44
        $region43: #{lstm_decode.1} parent=39 // pred_region
          %217 = dma.done [#allocation6], 2048
        $region44: #{lstm_decode.1} parent=39 // pred_fallthru
          _
        // Predicated region
        $region45: #{lstm_decode.1} parent=39 // pred_check
          %p218 = pneg %p102
        $region46: #{lstm_decode.1} parent=39 // pred_check_branch
          %220 = sbr.rel (%p218) target = $region48
        $region47: #{lstm_decode.1} parent=39 // pred_region
          %221 = dma.done [#allocation8], 1536
        $region48: #{lstm_decode.1} parent=39 // pred_fallthru
          _
        %p222 = scmp.lt.s32.totalorder %s18, 7
        %s223 = scalar_select %p222, %s18, 7
        %s224 = smul.addr %s223, 2
        %s225 = scalar_lea.vmem %s0, %s224
        %p226 = pneg %p39
        %p227 = pneg %p36
        %p228 = pneg %p60
        %p229 = pneg %p57
        %p230 = pneg %p81
        %p231 = pneg %p78
        %p232 = pneg %p102
        %p233 = pneg %p99
        %p234 = pneg %p123
        %p235 = pneg %p120
        %p236 = pneg %p149
        %p237 = pneg %p146
        %p238 = scmp.lt.s32.totalorder %s18, 7
        %s239 = scalar_select %p238, %s18, 7
        %s240 = smul.addr %s239, 2
        %s241 = smul.addr %s240, 2
        %s242 = scalar_lea.vmem %s5, %s241
        %p243 = scmp.lt.s32.totalorder %s18, 7
        %s244 = scalar_select %p243, %s18, 7
        %s245 = smul.addr %s244, 2
        %s246 = scalar_lea.vmem %s0, %s245
        %p247 = scmp.lt.s32.totalorder %s18, 7
        %s248 = scalar_select %p247, %s18, 7
        %s249 = smul.addr %s248, 2
        %s250 = smul.addr %s249, 2
        %s251 = scalar_lea.vmem %s5, %s250
        %p252 = scmp.eq.s32.totalorder %s18, 0
        // Predicated region
        $region49: #{lstm_decode.1} parent=39 // pred_check
          %p253 = pneg %p252
        $region50: #{lstm_decode.1} parent=39 // pred_check_branch
          %255 = sbr.rel (%p253) target = $region52
        $region51: #{lstm_decode.1} parent=39 // pred_region
          %v256 = vld [vmem:[%s1] sm:$0x3]
          %vm257 = vcmask 254976
          %258 = vst.msk [vmem:[#allocation4] sm:$0x3] %vm257, %v256
          %s259 = scalar_lea.vmem %s1, 2
          %v260 = vld [vmem:[%s259] sm:$0x3]
          %v261 = vld [vmem:[%s259 + $0x2] sm:$0x3]
          %262 = vst.msk [vmem:[#allocation2] sm:$0x3] %vm257, %v260
          %263 = vst.msk [vmem:[#allocation2 + $0x2] sm:$0x3] %vm257, %v261
          %s264 = scalar_lea.vmem %s1, 6
          %v265 = vld [vmem:[%s264] sm:$0x3]
          %v266 = vld [vmem:[%s264 + $0x2] sm:$0x3]
          %267 = vst.msk [vmem:[#allocation3] sm:$0x3] %vm257, %v265
          %268 = vst.msk [vmem:[#allocation3 + $0x2] sm:$0x3] %vm257, %v266
        $region52: #{lstm_decode.1} parent=39 // pred_fallthru
          _
        %v269 = vld [vmem:[%s246] sm:$0x3]
        %v270 = vld [vmem:[#allocation4] sm:$0x3]
        %v271 = vld [vmem:[#allocation7] sm:$0xff]
        %v272 = vld [vmem:[#allocation7 + $0x8] sm:$0xff]
        %v273 = vld [vmem:[#allocation7 + $0x10] sm:$0xff]
        %v274 = vld [vmem:[#allocation7 + $0x18] sm:$0xff]
        %s275 = scalar_lea.vmem [#allocation7], 32
        %v276 = vld [vmem:[%s275] sm:$0xff]
        %v277 = vld [vmem:[%s275 + $0x8] sm:$0xff]
        %v278 = vld [vmem:[%s275 + $0x10] sm:$0xff]
        %v279 = vld [vmem:[%s275 + $0x18] sm:$0xff]
        %vm280 = vcmask 261120
        %v282 = vsel %vm280, %v270, 0
        %284 = vmatprep.subr.mxu0 0.0
        %285 = vmatpush1.msra.mxu0 %v276
        %286 = vmatprep.subr.mxu0 0.0
        %287 = vmatpush1.msra.mxu0 %v277
        %288 = vmatprep.subr.mxu0 0.0
        %289 = vmatpush1.msra.mxu0 %v278
        %290 = vmatprep.subr.mxu0 0.0
        %291 = vmatpush1.msra.mxu0 %v279
        %292 = vmatprep.subr.mxu0 0.0
        %293 = vmatpush1.msra.mxu0 0.0
        %294 = vmatprep.subr.mxu0 0.0
        %295 = vmatpush1.msra.mxu0 0.0
        %296 = vmatprep.subr.mxu0 0.0
        %297 = vmatpush1.msra.mxu0 0.0
        %298 = vmatprep.subr.mxu0 0.0
        %299 = vmatpush1.msra.mxu0 0.0
        %300 = vmatprep.subr.mxu0 0.0
        %301 = vmatpush1.msra.mxu0 0.0
        %302 = vmatprep.subr.mxu0 0.0
        %303 = vmatpush1.msra.mxu0 0.0
        %304 = vmatprep.subr.mxu0 0.0
        %305 = vmatpush1.msra.mxu0 0.0
        %306 = vmatprep.subr.mxu0 0.0
        %307 = vmatpush1.msra.mxu0 0.0
        %308 = vmatprep.subr.mxu0 0.0
        %309 = vmatpush1.msra.mxu0 0.0
        %310 = vmatprep.subr.mxu0 0.0
        %311 = vmatpush1.msra.mxu0 0.0
        %312 = vmatprep.subr.mxu0 0.0
        %313 = vmatpush1.msra.mxu0 0.0
        %314 = vmatprep.subr.mxu0 0.0
        %315 = vmatpush1.msra.mxu0 0.0
        %316 = vmatprep.subr.mxu0 0.0
        %317 = vmatpush1.msra.mxu0 0.0
        %318 = vmatprep.subr.mxu0 0.0
        %319 = vmatpush1.msra.mxu0 0.0
        %320 = vmatprep.subr.mxu0 0.0
        %321 = vmatpush1.msra.mxu0 0.0
        %322 = vmatprep.subr.mxu0 0.0
        %323 = vmatpush1.msra.mxu0 0.0
        %324 = vmatprep.subr.mxu0 0.0
        %325 = vmatpush1.msra.mxu0 0.0
        %326 = vmatprep.subr.mxu0 0.0
        %327 = vmatpush1.msra.mxu0 0.0
        %328 = vmatprep.subr.mxu0 0.0
        %329 = vmatpush1.msra.mxu0 0.0
        %330 = vmatprep.subr.mxu0 0.0
        %331 = vmatpush1.msra.mxu0 0.0
        %332 = vmatprep.subr.mxu0 0.0
        %333 = vmatpush1.msra.mxu0 0.0
        %334 = vmatprep.subr.mxu0 0.0
        %335 = vmatpush1.msra.mxu0 0.0
        %336 = vmatprep.subr.mxu0 0.0
        %337 = vmatpush1.msra.mxu0 0.0
        %338 = vmatprep.subr.mxu0 0.0
        %339 = vmatpush1.msra.mxu0 0.0
        %340 = vmatprep.subr.mxu0 0.0
        %341 = vmatpush1.msra.mxu0 0.0
        %342 = vmatprep.subr.mxu0 0.0
        %343 = vmatpush1.msra.mxu0 0.0
        %344 = vmatprep.subr.mxu0 0.0
        %345 = vmatpush1.msra.mxu0 0.0
        %346 = vmatprep.subr.mxu0 0.0
        %347 = vmatpush1.msra.mxu0 0.0
        %348 = vmatprep.mubr.f32.mxu0 0.0
        %349 = vmatmul.mubr.f32.gmra.mrb[0].mxu0 %v282
        %v350 = vpop.f32.mrb[0].mxu0
        %v351 = vadd.f32 0.0, %v350
        %v352 = vpop.f32.mrb[0].mxu0
        %353 = vdwg.mxu0
        %v355 = vsel %vm280, %v269, 0
        %357 = vmatprep.subr.mxu0 0.0
        %358 = vmatpush1.msra.mxu0 %v271
        %359 = vmatprep.subr.mxu0 0.0
        %360 = vmatpush1.msra.mxu0 %v272
        %361 = vmatprep.subr.mxu0 0.0
        %362 = vmatpush1.msra.mxu0 %v273
        %363 = vmatprep.subr.mxu0 0.0
        %364 = vmatpush1.msra.mxu0 %v274
        %365 = vmatprep.subr.mxu0 0.0
        %366 = vmatpush1.msra.mxu0 0.0
        %367 = vmatprep.subr.mxu0 0.0
        %368 = vmatpush1.msra.mxu0 0.0
        %369 = vmatprep.subr.mxu0 0.0
        %370 = vmatpush1.msra.mxu0 0.0
        %371 = vmatprep.subr.mxu0 0.0
        %372 = vmatpush1.msra.mxu0 0.0
        %373 = vmatprep.subr.mxu0 0.0
        %374 = vmatpush1.msra.mxu0 0.0
        %375 = vmatprep.subr.mxu0 0.0
        %376 = vmatpush1.msra.mxu0 0.0
        %377 = vmatprep.subr.mxu0 0.0
        %378 = vmatpush1.msra.mxu0 0.0
        %379 = vmatprep.subr.mxu0 0.0
        %380 = vmatpush1.msra.mxu0 0.0
        %381 = vmatprep.subr.mxu0 0.0
        %382 = vmatpush1.msra.mxu0 0.0
        %383 = vmatprep.subr.mxu0 0.0
        %384 = vmatpush1.msra.mxu0 0.0
        %385 = vmatprep.subr.mxu0 0.0
        %386 = vmatpush1.msra.mxu0 0.0
        %387 = vmatprep.subr.mxu0 0.0
        %388 = vmatpush1.msra.mxu0 0.0
        %389 = vmatprep.subr.mxu0 0.0
        %390 = vmatpush1.msra.mxu0 0.0
        %391 = vmatprep.subr.mxu0 0.0
        %392 = vmatpush1.msra.mxu0 0.0
        %393 = vmatprep.subr.mxu0 0.0
        %394 = vmatpush1.msra.mxu0 0.0
        %395 = vmatprep.subr.mxu0 0.0
        %396 = vmatpush1.msra.mxu0 0.0
        %397 = vmatprep.subr.mxu0 0.0
        %398 = vmatpush1.msra.mxu0 0.0
        %399 = vmatprep.subr.mxu0 0.0
        %400 = vmatpush1.msra.mxu0 0.0
        %401 = vmatprep.subr.mxu0 0.0
        %402 = vmatpush1.msra.mxu0 0.0
        %403 = vmatprep.subr.mxu0 0.0
        %404 = vmatpush1.msra.mxu0 0.0
        %405 = vmatprep.subr.mxu0 0.0
        %406 = vmatpush1.msra.mxu0 0.0
        %407 = vmatprep.subr.mxu0 0.0
        %408 = vmatpush1.msra.mxu0 0.0
        %409 = vmatprep.subr.mxu0 0.0
        %410 = vmatpush1.msra.mxu0 0.0
        %411 = vmatprep.subr.mxu0 0.0
        %412 = vmatpush1.msra.mxu0 0.0
        %413 = vmatprep.subr.mxu0 0.0
        %414 = vmatpush1.msra.mxu0 0.0
        %415 = vmatprep.subr.mxu0 0.0
        %416 = vmatpush1.msra.mxu0 0.0
        %417 = vmatprep.subr.mxu0 0.0
        %418 = vmatpush1.msra.mxu0 0.0
        %419 = vmatprep.subr.mxu0 0.0
        %420 = vmatpush1.msra.mxu0 0.0
        %421 = vmatprep.mubr.f32.mxu0 0.0
        %422 = vmatmul.mubr.f32.gmra.mrb[0].mxu0 %v355
        %v423 = vpop.f32.mrb[0].mxu0
        %v424 = vadd.f32 %v351, %v423
        %v425 = vpop.f32.mrb[0].mxu0
        %426 = vdwg.mxu0
        %v427 = vld [vmem:[%s4 + $0x2] sm:$0x1]
        %v428 = vlaneseq
        %v429 = vshrl.u32 %v428, 7
        %v430 = vsub.s32 0, %v429
        %v431 = vrot.slane %v427, %v430
        %v432 = vadd.f32 %v424, %v431
        %v433 = vld [vmem:[#allocation2] sm:$0x3]
        %v434 = vld [vmem:[#allocation5 + $0x20] sm:$0xff]
        %v435 = vld [vmem:[#allocation5 + $0x28] sm:$0xff]
        %v436 = vld [vmem:[#allocation5 + $0x30] sm:$0xff]
        %v437 = vld [vmem:[#allocation5 + $0x38] sm:$0xff]
        %v439 = vsel %vm280, %v433, 0
        %441 = vmatprep.subr.mxu0 0.0
        %442 = vmatpush1.msra.mxu0 %v434
        %443 = vmatprep.subr.mxu0 0.0
        %444 = vmatpush1.msra.mxu0 %v435
        %445 = vmatprep.subr.mxu0 0.0
        %446 = vmatpush1.msra.mxu0 %v436
        %447 = vmatprep.subr.mxu0 0.0
        %448 = vmatpush1.msra.mxu0 %v437
        %449 = vmatprep.subr.mxu0 0.0
        %450 = vmatpush1.msra.mxu0 0.0
        %451 = vmatprep.subr.mxu0 0.0
        %452 = vmatpush1.msra.mxu0 0.0
        %453 = vmatprep.subr.mxu0 0.0
        %454 = vmatpush1.msra.mxu0 0.0
        %455 = vmatprep.subr.mxu0 0.0
        %456 = vmatpush1.msra.mxu0 0.0
        %457 = vmatprep.subr.mxu0 0.0
        %458 = vmatpush1.msra.mxu0 0.0
        %459 = vmatprep.subr.mxu0 0.0
        %460 = vmatpush1.msra.mxu0 0.0
        %461 = vmatprep.subr.mxu0 0.0
        %462 = vmatpush1.msra.mxu0 0.0
        %463 = vmatprep.subr.mxu0 0.0
        %464 = vmatpush1.msra.mxu0 0.0
        %465 = vmatprep.subr.mxu0 0.0
        %466 = vmatpush1.msra.mxu0 0.0
        %467 = vmatprep.subr.mxu0 0.0
        %468 = vmatpush1.msra.mxu0 0.0
        %469 = vmatprep.subr.mxu0 0.0
        %470 = vmatpush1.msra.mxu0 0.0
        %471 = vmatprep.subr.mxu0 0.0
        %472 = vmatpush1.msra.mxu0 0.0
        %473 = vmatprep.subr.mxu0 0.0
        %474 = vmatpush1.msra.mxu0 0.0
        %475 = vmatprep.subr.mxu0 0.0
        %476 = vmatpush1.msra.mxu0 0.0
        %477 = vmatprep.subr.mxu0 0.0
        %478 = vmatpush1.msra.mxu0 0.0
        %479 = vmatprep.subr.mxu0 0.0
        %480 = vmatpush1.msra.mxu0 0.0
        %481 = vmatprep.subr.mxu0 0.0
        %482 = vmatpush1.msra.mxu0 0.0
        %483 = vmatprep.subr.mxu0 0.0
        %484 = vmatpush1.msra.mxu0 0.0
        %485 = vmatprep.subr.mxu0 0.0
        %486 = vmatpush1.msra.mxu0 0.0
        %487 = vmatprep.subr.mxu0 0.0
        %488 = vmatpush1.msra.mxu0 0.0
        %489 = vmatprep.subr.mxu0 0.0
        %490 = vmatpush1.msra.mxu0 0.0
        %491 = vmatprep.subr.mxu0 0.0
        %492 = vmatpush1.msra.mxu0 0.0
        %493 = vmatprep.subr.mxu0 0.0
        %494 = vmatpush1.msra.mxu0 0.0
        %495 = vmatprep.subr.mxu0 0.0
        %496 = vmatpush1.msra.mxu0 0.0
        %497 = vmatprep.subr.mxu0 0.0
        %498 = vmatpush1.msra.mxu0 0.0
        %499 = vmatprep.subr.mxu0 0.0
        %500 = vmatpush1.msra.mxu0 0.0
        %501 = vmatprep.subr.mxu0 0.0
        %502 = vmatpush1.msra.mxu0 0.0
        %503 = vmatprep.subr.mxu0 0.0
        %504 = vmatpush1.msra.mxu0 0.0
        %505 = vmatprep.mubr.f32.mxu0 0.0
        %506 = vmatmul.mubr.f32.gmra.mrb[0].mxu0 %v439
        %v507 = vpop.f32.mrb[0].mxu0
        %v508 = vadd.f32 0.0, %v507
        %v509 = vpop.f32.mrb[0].mxu0
        %510 = vdwg.mxu0
        %s511 = scalar_lea.vmem [#allocation2], 2
        %v512 = vld [vmem:[%s511] sm:$0x3]
        %s513 = scalar_lea.vmem [#allocation5], 64
        %v514 = vld [vmem:[%s513 + $0x20] sm:$0xff]
        %v515 = vld [vmem:[%s513 + $0x28] sm:$0xff]
        %v516 = vld [vmem:[%s513 + $0x30] sm:$0xff]
        %v517 = vld [vmem:[%s513 + $0x38] sm:$0xff]
        %v519 = vsel %vm280, %v512, 0
        %521 = vmatprep.subr.mxu0 0.0
        %522 = vmatpush1.msra.mxu0 %v514
        %523 = vmatprep.subr.mxu0 0.0
        %524 = vmatpush1.msra.mxu0 %v515
        %525 = vmatprep.subr.mxu0 0.0
        %526 = vmatpush1.msra.mxu0 %v516
        %527 = vmatprep.subr.mxu0 0.0
        %528 = vmatpush1.msra.mxu0 %v517
        %529 = vmatprep.subr.mxu0 0.0
        %530 = vmatpush1.msra.mxu0 0.0
        %531 = vmatprep.subr.mxu0 0.0
        %532 = vmatpush1.msra.mxu0 0.0
        %533 = vmatprep.subr.mxu0 0.0
        %534 = vmatpush1.msra.mxu0 0.0
        %535 = vmatprep.subr.mxu0 0.0
        %536 = vmatpush1.msra.mxu0 0.0
        %537 = vmatprep.subr.mxu0 0.0
        %538 = vmatpush1.msra.mxu0 0.0
        %539 = vmatprep.subr.mxu0 0.0
        %540 = vmatpush1.msra.mxu0 0.0
        %541 = vmatprep.subr.mxu0 0.0
        %542 = vmatpush1.msra.mxu0 0.0
        %543 = vmatprep.subr.mxu0 0.0
        %544 = vmatpush1.msra.mxu0 0.0
        %545 = vmatprep.subr.mxu0 0.0
        %546 = vmatpush1.msra.mxu0 0.0
        %547 = vmatprep.subr.mxu0 0.0
        %548 = vmatpush1.msra.mxu0 0.0
        %549 = vmatprep.subr.mxu0 0.0
        %550 = vmatpush1.msra.mxu0 0.0
        %551 = vmatprep.subr.mxu0 0.0
        %552 = vmatpush1.msra.mxu0 0.0
        %553 = vmatprep.subr.mxu0 0.0
        %554 = vmatpush1.msra.mxu0 0.0
        %555 = vmatprep.subr.mxu0 0.0
        %556 = vmatpush1.msra.mxu0 0.0
        %557 = vmatprep.subr.mxu0 0.0
        %558 = vmatpush1.msra.mxu0 0.0
        %559 = vmatprep.subr.mxu0 0.0
        %560 = vmatpush1.msra.mxu0 0.0
        %561 = vmatprep.subr.mxu0 0.0
        %562 = vmatpush1.msra.mxu0 0.0
        %563 = vmatprep.subr.mxu0 0.0
        %564 = vmatpush1.msra.mxu0 0.0
        %565 = vmatprep.subr.mxu0 0.0
        %566 = vmatpush1.msra.mxu0 0.0
        %567 = vmatprep.subr.mxu0 0.0
        %568 = vmatpush1.msra.mxu0 0.0
        %569 = vmatprep.subr.mxu0 0.0
        %570 = vmatpush1.msra.mxu0 0.0
        %571 = vmatprep.subr.mxu0 0.0
        %572 = vmatpush1.msra.mxu0 0.0
        %573 = vmatprep.subr.mxu0 0.0
        %574 = vmatpush1.msra.mxu0 0.0
        %575 = vmatprep.subr.mxu0 0.0
        %576 = vmatpush1.msra.mxu0 0.0
        %577 = vmatprep.subr.mxu0 0.0
        %578 = vmatpush1.msra.mxu0 0.0
        %579 = vmatprep.subr.mxu0 0.0
        %580 = vmatpush1.msra.mxu0 0.0
        %581 = vmatprep.subr.mxu0 0.0
        %582 = vmatpush1.msra.mxu0 0.0
        %583 = vmatprep.subr.mxu0 0.0
        %584 = vmatpush1.msra.mxu0 0.0
        %585 = vmatprep.mubr.f32.mxu0 0.0
        %586 = vmatmul.mubr.f32.gmra.mrb[0].mxu0 %v519
        %v587 = vpop.f32.mrb[0].mxu0
        %v588 = vadd.f32 0.0, %v587
        %v589 = vpop.f32.mrb[0].mxu0
        %590 = vdwg.mxu0
        %v591 = vld [vmem:[#allocation5] sm:$0xff]
        %v592 = vld [vmem:[#allocation5 + $0x8] sm:$0xff]
        %v593 = vld [vmem:[#allocation5 + $0x10] sm:$0xff]
        %v594 = vld [vmem:[#allocation5 + $0x18] sm:$0xff]
        %v596 = vsel %vm280, %v432, 0
        %598 = vmatprep.subr.mxu0 0.0
        %599 = vmatpush1.msra.mxu0 %v591
        %600 = vmatprep.subr.mxu0 0.0
        %601 = vmatpush1.msra.mxu0 %v592
        %602 = vmatprep.subr.mxu0 0.0
        %603 = vmatpush1.msra.mxu0 %v593
        %604 = vmatprep.subr.mxu0 0.0
        %605 = vmatpush1.msra.mxu0 %v594
        %606 = vmatprep.subr.mxu0 0.0
        %607 = vmatpush1.msra.mxu0 0.0
        %608 = vmatprep.subr.mxu0 0.0
        %609 = vmatpush1.msra.mxu0 0.0
        %610 = vmatprep.subr.mxu0 0.0
        %611 = vmatpush1.msra.mxu0 0.0
        %612 = vmatprep.subr.mxu0 0.0
        %613 = vmatpush1.msra.mxu0 0.0
        %614 = vmatprep.subr.mxu0 0.0
        %615 = vmatpush1.msra.mxu0 0.0
        %616 = vmatprep.subr.mxu0 0.0
        %617 = vmatpush1.msra.mxu0 0.0
        %618 = vmatprep.subr.mxu0 0.0
        %619 = vmatpush1.msra.mxu0 0.0
        %620 = vmatprep.subr.mxu0 0.0
        %621 = vmatpush1.msra.mxu0 0.0
        %622 = vmatprep.subr.mxu0 0.0
        %623 = vmatpush1.msra.mxu0 0.0
        %624 = vmatprep.subr.mxu0 0.0
        %625 = vmatpush1.msra.mxu0 0.0
        %626 = vmatprep.subr.mxu0 0.0
        %627 = vmatpush1.msra.mxu0 0.0
        %628 = vmatprep.subr.mxu0 0.0
        %629 = vmatpush1.msra.mxu0 0.0
        %630 = vmatprep.subr.mxu0 0.0
        %631 = vmatpush1.msra.mxu0 0.0
        %632 = vmatprep.subr.mxu0 0.0
        %633 = vmatpush1.msra.mxu0 0.0
        %634 = vmatprep.subr.mxu0 0.0
        %635 = vmatpush1.msra.mxu0 0.0
        %636 = vmatprep.subr.mxu0 0.0
        %637 = vmatpush1.msra.mxu0 0.0
        %638 = vmatprep.subr.mxu0 0.0
        %639 = vmatpush1.msra.mxu0 0.0
        %640 = vmatprep.subr.mxu0 0.0
        %641 = vmatpush1.msra.mxu0 0.0
        %642 = vmatprep.subr.mxu0 0.0
        %643 = vmatpush1.msra.mxu0 0.0
        %644 = vmatprep.subr.mxu0 0.0
        %645 = vmatpush1.msra.mxu0 0.0
        %646 = vmatprep.subr.mxu0 0.0
        %647 = vmatpush1.msra.mxu0 0.0
        %648 = vmatprep.subr.mxu0 0.0
        %649 = vmatpush1.msra.mxu0 0.0
        %650 = vmatprep.subr.mxu0 0.0
        %651 = vmatpush1.msra.mxu0 0.0
        %652 = vmatprep.subr.mxu0 0.0
        %653 = vmatpush1.msra.mxu0 0.0
        %654 = vmatprep.subr.mxu0 0.0
        %655 = vmatpush1.msra.mxu0 0.0
        %656 = vmatprep.subr.mxu0 0.0
        %657 = vmatpush1.msra.mxu0 0.0
        %658 = vmatprep.subr.mxu0 0.0
        %659 = vmatpush1.msra.mxu0 0.0
        %660 = vmatprep.subr.mxu0 0.0
        %661 = vmatpush1.msra.mxu0 0.0
        %662 = vmatprep.mubr.f32.mxu0 0.0
        %663 = vmatmul.mubr.f32.gmra.mrb[0].mxu0 %v596
        %v664 = vpop.f32.mrb[0].mxu0
        %v665 = vadd.f32 %v508, %v664
        %v666 = vpop.f32.mrb[0].mxu0
        %667 = vdwg.mxu0
        %v668 = vld [vmem:[%s4] sm:$0x1]
        %v669 = vlaneseq
        %v670 = vshrl.u32 %v669, 7
        %v671 = vsub.s32 0, %v670
        %v672 = vrot.slane %v668, %v671
        %v673 = vadd.f32 %v665, %v672
        %v674 = vxor.u32 %v673, 2147483648
        %v675 = vmul.f32 %v674, 1.442695
        %v676 = vpow.pop %v675
        %v677 = vadd.f32 %v676, 1.0
        %v678 = vrcp.pop %v677
        %v679 = vmul.f32 1.0, %v678
        %v680 = vtanh.pop %v673
        %v681 = vld [vmem:[#allocation3] sm:$0x3]
        %683 = vrot.lane.b32.xlu0 %v681, 32
        %v684 = vpop.permute.xlu0 %683
        %v686 = vmul.f32 %v679, %v684
        %688 = vrot.lane.b32.xlu0 %v680, 64
        %v689 = vpop.permute.xlu0 %688
        %v691 = vmul.f32 %v679, %v689
        %693 = vrot.lane.b32.xlu0 %v691, 32
        %v694 = vpop.permute.xlu0 %693
        %v696 = vadd.f32 %v686, %v694
        %v697 = vtanh.pop %v696
        %699 = vrot.lane.b32.xlu0 %v697, 64
        %v700 = vpop.permute.xlu0 %699
        %v702 = vmul.f32 %v679, %v700
        %704 = vrot.lane.b32.xlu0 %v702, 32
        %v705 = vpop.permute.xlu0 %704
        %vm707 = vcmask 254976
        %708 = vst.msk [vmem:[#allocation2] sm:$0x3] %vm707, %v705
        %710 = vrot.lane.b32.xlu0 %v696, 96
        %v711 = vpop.permute.xlu0 %710
        %713 = vst.msk [vmem:[#allocation3] sm:$0x3] %vm707, %v711
        %v714 = vld [vmem:[%s513] sm:$0xff]
        %v715 = vld [vmem:[%s513 + $0x8] sm:$0xff]
        %v716 = vld [vmem:[%s513 + $0x10] sm:$0xff]
        %v717 = vld [vmem:[%s513 + $0x18] sm:$0xff]
        %v718 = vsel %vm280, %v705, 0
        %720 = vmatprep.subr.mxu0 0.0
        %721 = vmatpush1.msra.mxu0 %v714
        %722 = vmatprep.subr.mxu0 0.0
        %723 = vmatpush1.msra.mxu0 %v715
        %724 = vmatprep.subr.mxu0 0.0
        %725 = vmatpush1.msra.mxu0 %v716
        %726 = vmatprep.subr.mxu0 0.0
        %727 = vmatpush1.msra.mxu0 %v717
        %728 = vmatprep.subr.mxu0 0.0
        %729 = vmatpush1.msra.mxu0 0.0
        %730 = vmatprep.subr.mxu0 0.0
        %731 = vmatpush1.msra.mxu0 0.0
        %732 = vmatprep.subr.mxu0 0.0
        %733 = vmatpush1.msra.mxu0 0.0
        %734 = vmatprep.subr.mxu0 0.0
        %735 = vmatpush1.msra.mxu0 0.0
        %736 = vmatprep.subr.mxu0 0.0
        %737 = vmatpush1.msra.mxu0 0.0
        %738 = vmatprep.subr.mxu0 0.0
        %739 = vmatpush1.msra.mxu0 0.0
        %740 = vmatprep.subr.mxu0 0.0
        %741 = vmatpush1.msra.mxu0 0.0
        %742 = vmatprep.subr.mxu0 0.0
        %743 = vmatpush1.msra.mxu0 0.0
        %744 = vmatprep.subr.mxu0 0.0
        %745 = vmatpush1.msra.mxu0 0.0
        %746 = vmatprep.subr.mxu0 0.0
        %747 = vmatpush1.msra.mxu0 0.0
        %748 = vmatprep.subr.mxu0 0.0
        %749 = vmatpush1.msra.mxu0 0.0
        %750 = vmatprep.subr.mxu0 0.0
        %751 = vmatpush1.msra.mxu0 0.0
        %752 = vmatprep.subr.mxu0 0.0
        %753 = vmatpush1.msra.mxu0 0.0
        %754 = vmatprep.subr.mxu0 0.0
        %755 = vmatpush1.msra.mxu0 0.0
        %756 = vmatprep.subr.mxu0 0.0
        %757 = vmatpush1.msra.mxu0 0.0
        %758 = vmatprep.subr.mxu0 0.0
        %759 = vmatpush1.msra.mxu0 0.0
        %760 = vmatprep.subr.mxu0 0.0
        %761 = vmatpush1.msra.mxu0 0.0
        %762 = vmatprep.subr.mxu0 0.0
        %763 = vmatpush1.msra.mxu0 0.0
        %764 = vmatprep.subr.mxu0 0.0
        %765 = vmatpush1.msra.mxu0 0.0
        %766 = vmatprep.subr.mxu0 0.0
        %767 = vmatpush1.msra.mxu0 0.0
        %768 = vmatprep.subr.mxu0 0.0
        %769 = vmatpush1.msra.mxu0 0.0
        %770 = vmatprep.subr.mxu0 0.0
        %771 = vmatpush1.msra.mxu0 0.0
        %772 = vmatprep.subr.mxu0 0.0
        %773 = vmatpush1.msra.mxu0 0.0
        %774 = vmatprep.subr.mxu0 0.0
        %775 = vmatpush1.msra.mxu0 0.0
        %776 = vmatprep.subr.mxu0 0.0
        %777 = vmatpush1.msra.mxu0 0.0
        %778 = vmatprep.subr.mxu0 0.0
        %779 = vmatpush1.msra.mxu0 0.0
        %780 = vmatprep.subr.mxu0 0.0
        %781 = vmatpush1.msra.mxu0 0.0
        %782 = vmatprep.subr.mxu0 0.0
        %783 = vmatpush1.msra.mxu0 0.0
        %784 = vmatprep.mubr.f32.mxu0 0.0
        %785 = vmatmul.mubr.f32.gmra.mrb[0].mxu0 %v718
        %v786 = vpop.f32.mrb[0].mxu0
        %v787 = vadd.f32 %v588, %v786
        %v788 = vpop.f32.mrb[0].mxu0
        %789 = vdwg.mxu0
        %v790 = vld [vmem:[%s4 + $0x1] sm:$0x1]
        %v791 = vlaneseq
        %v792 = vshrl.u32 %v791, 7
        %v793 = vsub.s32 0, %v792
        %v794 = vrot.slane %v790, %v793
        %v795 = vadd.f32 %v787, %v794
        %v796 = vxor.u32 %v795, 2147483648
        %v797 = vmul.f32 %v796, 1.442695
        %v798 = vpow.pop %v797
        %v799 = vadd.f32 %v798, 1.0
        %v800 = vrcp.pop %v799
        %v801 = vmul.f32 1.0, %v800
        %v802 = vtanh.pop %v795
        %s803 = scalar_lea.vmem [#allocation3], 2
        %v804 = vld [vmem:[%s803] sm:$0x3]
        %806 = vrot.lane.b32.xlu0 %v804, 32
        %v807 = vpop.permute.xlu0 %806
        %v809 = vmul.f32 %v801, %v807
        %811 = vrot.lane.b32.xlu0 %v802, 64
        %v812 = vpop.permute.xlu0 %811
        %v814 = vmul.f32 %v801, %v812
        %816 = vrot.lane.b32.xlu0 %v814, 32
        %v817 = vpop.permute.xlu0 %816
        %v819 = vadd.f32 %v809, %v817
        %v820 = vtanh.pop %v819
        %822 = vrot.lane.b32.xlu0 %v820, 64
        %v823 = vpop.permute.xlu0 %822
        %v825 = vmul.f32 %v801, %v823
        %827 = vrot.lane.b32.xlu0 %v825, 32
        %v828 = vpop.permute.xlu0 %827
        %830 = vst.msk [vmem:[%s511] sm:$0x3] %vm707, %v828
        %832 = vrot.lane.b32.xlu0 %v819, 96
        %v833 = vpop.permute.xlu0 %832
        %835 = vst.msk [vmem:[%s803] sm:$0x3] %vm707, %v833
        %s836 = scalar_lea.vmem [#allocation7], 64
        %v837 = vld [vmem:[%s836] sm:$0xff]
        %v838 = vld [vmem:[%s836 + $0x8] sm:$0xff]
        %v839 = vld [vmem:[%s836 + $0x10] sm:$0xff]
        %v840 = vld [vmem:[%s836 + $0x18] sm:$0xff]
        %v841 = vld [vmem:[%s4 + $0x3] sm:$0x1]
        %v842 = vlaneseq
        %v843 = vshrl.u32 %v842, 7
        %v844 = vsub.s32 0, %v843
        %v845 = vrot.slane %v841, %v844
        %v846 = vsel %vm280, %v828, 0
        %848 = vmatprep.subr.mxu0 0.0
        %849 = vmatpush1.msra.mxu0 %v837
        %850 = vmatprep.subr.mxu0 0.0
        %851 = vmatpush1.msra.mxu0 %v838
        %852 = vmatprep.subr.mxu0 0.0
        %853 = vmatpush1.msra.mxu0 %v839
        %854 = vmatprep.subr.mxu0 0.0
        %855 = vmatpush1.msra.mxu0 %v840
        %856 = vmatprep.subr.mxu0 0.0
        %857 = vmatpush1.msra.mxu0 0.0
        %858 = vmatprep.subr.mxu0 0.0
        %859 = vmatpush1.msra.mxu0 0.0
        %860 = vmatprep.subr.mxu0 0.0
        %861 = vmatpush1.msra.mxu0 0.0
        %862 = vmatprep.subr.mxu0 0.0
        %863 = vmatpush1.msra.mxu0 0.0
        %864 = vmatprep.subr.mxu0 0.0
        %865 = vmatpush1.msra.mxu0 0.0
        %866 = vmatprep.subr.mxu0 0.0
        %867 = vmatpush1.msra.mxu0 0.0
        %868 = vmatprep.subr.mxu0 0.0
        %869 = vmatpush1.msra.mxu0 0.0
        %870 = vmatprep.subr.mxu0 0.0
        %871 = vmatpush1.msra.mxu0 0.0
        %872 = vmatprep.subr.mxu0 0.0
        %873 = vmatpush1.msra.mxu0 0.0
        %874 = vmatprep.subr.mxu0 0.0
        %875 = vmatpush1.msra.mxu0 0.0
        %876 = vmatprep.subr.mxu0 0.0
        %877 = vmatpush1.msra.mxu0 0.0
        %878 = vmatprep.subr.mxu0 0.0
        %879 = vmatpush1.msra.mxu0 0.0
        %880 = vmatprep.subr.mxu0 0.0
        %881 = vmatpush1.msra.mxu0 0.0
        %882 = vmatprep.subr.mxu0 0.0
        %883 = vmatpush1.msra.mxu0 0.0
        %884 = vmatprep.subr.mxu0 0.0
        %885 = vmatpush1.msra.mxu0 0.0
        %886 = vmatprep.subr.mxu0 0.0
        %887 = vmatpush1.msra.mxu0 0.0
        %888 = vmatprep.subr.mxu0 0.0
        %889 = vmatpush1.msra.mxu0 0.0
        %890 = vmatprep.subr.mxu0 0.0
        %891 = vmatpush1.msra.mxu0 0.0
        %892 = vmatprep.subr.mxu0 0.0
        %893 = vmatpush1.msra.mxu0 0.0
        %894 = vmatprep.subr.mxu0 0.0
        %895 = vmatpush1.msra.mxu0 0.0
        %896 = vmatprep.subr.mxu0 0.0
        %897 = vmatpush1.msra.mxu0 0.0
        %898 = vmatprep.subr.mxu0 0.0
        %899 = vmatpush1.msra.mxu0 0.0
        %900 = vmatprep.subr.mxu0 0.0
        %901 = vmatpush1.msra.mxu0 0.0
        %902 = vmatprep.subr.mxu0 0.0
        %903 = vmatpush1.msra.mxu0 0.0
        %904 = vmatprep.subr.mxu0 0.0
        %905 = vmatpush1.msra.mxu0 0.0
        %906 = vmatprep.subr.mxu0 0.0
        %907 = vmatpush1.msra.mxu0 0.0
        %908 = vmatprep.subr.mxu0 0.0
        %909 = vmatpush1.msra.mxu0 0.0
        %910 = vmatprep.subr.mxu0 0.0
        %911 = vmatpush1.msra.mxu0 0.0
        %912 = vmatprep.mubr.f32.mxu0 0.0
        %913 = vmatmul.mubr.f32.gmra.mrb[0].mxu0 %v846
        %v914 = vpop.f32.mrb[0].mxu0
        %v915 = vadd.f32 %v845, %v914
        %v916 = vpop.f32.mrb[0].mxu0
        %917 = vdwg.mxu0
        %918 = vst.msk [vmem:[#allocation4] sm:$0x3] %vm707, %v915
        %v919 = vld [vmem:[#allocation2] sm:$0x3]
        %v920 = vld [vmem:[%s511] sm:$0x3]
        %v921 = vld [vmem:[#allocation3] sm:$0x3]
        %v922 = vld [vmem:[%s803] sm:$0x3]
        %924 = vrot.lane.b32.xlu0 %v919, 32
        %v925 = vpop.permute.xlu0 %924
        %928 = vrot.lane.b32.xlu0 %v920, 64
        %v929 = vpop.permute.xlu0 %928
        %932 = vrot.lane.b32.xlu0 %v921, 96
        %v933 = vpop.permute.xlu0 %932
        %v935 = vsel %vm280, %v915, %v925
        %vm936 = vcmask 523264
        %v937 = vsel %vm936, %v935, %v929
        %vm938 = vcmask 785408
        %v939 = vsel %vm938, %v937, %v933
        %v942 = vcombine.low %v939, %v922
        %v944 = vunpack.c.l.s4 1983009808
        %v945 = vunpack.c.0.s8 %v944
        %v946 = vlaneseq
        %v947 = vshrl.u32 %v946, 7
        %v948 = vsub.s32 %v945, %v947
        %v949 = vrot.slane %v942, %v948
        %vm951 = vcmask 1041408
        %vm952 = vcmask 257026
        %vm953 = vmor %vm952, %vm951
        %954 = vst.msk [vmem:[%s251] sm:$0xf] %vm953, %v949
        %p955 = scmp.lt.s32.totalorder %s18, 7
        %s956 = scalar_select %p955, %s18, 7
        %s957 = smul.addr %s956, 2
        %s958 = smul.addr %s957, 2
        %s959 = scalar_lea.vmem %s5, %s958
        // Predicated region
        $region53: #{lstm_decode.1} parent=39 // pred_check
          %p960 = pneg %p146
        $region54: #{lstm_decode.1} parent=39 // pred_check_branch
          %962 = sbr.rel (%p960) target = $region56
        $region55: #{lstm_decode.1} parent=39 // pred_region
          _
        $region56: #{lstm_decode.1} parent=39 // pred_fallthru
          _
      $region40: #{lstm_decode.1} parent=5 // pred_fallthru
        _
      %p963 = scmp.le.s32.totalorder 2, %s13
      // Predicated region
      $region57: #{lstm_decode.1} parent=5 // pred_check
        %p964 = pneg %p963
      $region58: #{lstm_decode.1} parent=5 // pred_check_branch
        %966 = sbr.rel (%p964) target = $region60
      $region59: #{lstm_decode.1} parent=5 // pred_region
        %s967 = ssub.s32 %s13, 2
        // Predicated region
        $region61: #{lstm_decode.1} parent=59 // pred_check
          %p968 = pneg %p152
        $region62: #{lstm_decode.1} parent=59 // pred_check_branch
          %970 = sbr.rel (%p968) target = $region64
        $region63: #{lstm_decode.1} parent=59 // pred_region
          %p971 = scmp.lt.s32.totalorder %s19, 7
          %s972 = scalar_select %p971, %s19, 7
          %s973 = smul.addr %s972, 2
          %s974 = smul.addr %s973, 2
          %s975 = scalar_lea.vmem %s5, %s974
        $region64: #{lstm_decode.1} parent=59 // pred_fallthru
          _
      $region60: #{lstm_decode.1} parent=5 // pred_fallthru
        _
    $region6: #{lstm_decode.1} parent=1 // loop_footer
      %s17 = sadd.s32 1, %s13
    $region7: #{lstm_decode.1} parent=1 // loop_footer_branch
      %12 = sbr.rel target = $region3
    $region8: #{lstm_decode.1} parent=1 // loop_exit
      _
    %976 = vsyncpa [#allocation6], 1
    %s977 = scalar_lea.sflag [#allocation6], 1
    %978 = vsyncpa %s977, 1
    %979 = vsyncpa [#allocation8], 1

</llo_original>
